<compile_context>
chip_gen: v5e
topology: v5e:2x2
jax: 0.10.0
libtpu: 0.0.40
codegen_flags: <defaults>
</compile_context>

<pallas_src>
import jax
import jax.numpy as jnp
from jax.experimental import pallas as pl
from jax.experimental.pallas import tpu as pltpu


_LANES = 512  # last-dim width of the flattened slab (multiple of 128)


def _cdiv(a, b):
    return -(-a // b)


def _round_up(a, b):
    return _cdiv(a, b) * b


def _complex_prelu_kernel(alpha_ref, x_ref, o_ref):
    # Grid axis 0 is the plane: 0 = real, 1 = imag. Pick that plane's slope
    # from SMEM.
    p = pl.program_id(0)
    a = alpha_ref[p]

    x = x_ref[...]
    # PReLU(x) = max(0, x) + a * min(0, x)  ==  where(x >= 0, x, a * x)
    o_ref[...] = jnp.where(x >= 0, x, a * x)


def complex_prelu(x_complex, alpha_real, alpha_imag, *, tile_rows=1024):
    """Apply ComplexPReLU to a complex tensor via a Pallas TPU kernel."""
    orig_shape = x_complex.shape
    n = x_complex.size

    xr = jnp.real(x_complex).astype(jnp.float32).reshape(-1)
    xi = jnp.imag(x_complex).astype(jnp.float32).reshape(-1)

    # Lane-dense slab sizing: pad the flat element count only up to a whole
    # number of (8, _LANES) row groups (<= 4095 padded elements). PReLU(0)==0,
    # so padded zeros are harmless and sliced away after.
    rows = max(1, _cdiv(n, _LANES))
    rows8 = _round_up(rows, 8)
    n_padded = rows8 * _LANES

    planes = jnp.stack([xr, xi])               # (2, n)
    if n_padded != n:
        planes = jnp.pad(planes, ((0, 0), (0, n_padded - n)))
    slab = planes.reshape(2, rows8, _LANES)    # (2, rows8, 512)

    # Per-step tile: clamp to the slab height; keep a multiple of 8. The row
    # grid uses cdiv, so a partial last block is fine (Pallas masks it).
    tile_rows = int(max(8, min(tile_rows, rows8)) // 8 * 8)
    n_row_blocks = _cdiv(rows8, tile_rows)
    grid = (2, n_row_blocks)

    alpha = jnp.stack([
        jnp.asarray(alpha_real, jnp.float32).reshape(()),
        jnp.asarray(alpha_imag, jnp.float32).reshape(()),
    ])                                         # (2,) in SMEM

    smem_spec = pl.BlockSpec(memory_space=pltpu.MemorySpace.SMEM)
    data_spec = pl.BlockSpec((1, tile_rows, _LANES), lambda p, i: (p, i, 0))

    slab_bytes = 2 * rows8 * _LANES * 4

    out = pl.pallas_call(
        _complex_prelu_kernel,
        grid=grid,
        in_specs=[smem_spec, data_spec],
        out_specs=data_spec,
        out_shape=jax.ShapeDtypeStruct((2, rows8, _LANES), jnp.float32),
        # Elementwise, same shape/dtype: reuse the input slab buffer.
        input_output_aliases={1: 0},
        compiler_params=pltpu.CompilerParams(
            dimension_semantics=("parallel", "parallel")),
        cost_estimate=pl.CostEstimate(
            flops=3 * 2 * rows8 * _LANES,      # cmp + select + mul per elem
            transcendentals=0,
            bytes_accessed=2 * slab_bytes),    # read + write the slab
    )(alpha, slab)

    out_r = out[0].reshape(-1)[:n].reshape(orig_shape)
    out_i = out[1].reshape(-1)[:n].reshape(orig_shape)
    return jax.lax.complex(out_r, out_i)


def _reference(x_complex, alpha_real, alpha_imag):
    xr = jnp.real(x_complex)
    xi = jnp.imag(x_complex)
    pr = jnp.where(xr >= 0, xr, alpha_real * xr)
    pi = jnp.where(xi >= 0, xi, alpha_imag * xi)
    return jax.lax.complex(pr, pi)


if __name__ == "__main__":
    key = jax.random.PRNGKey(0)
    k1, k2, k3, k4, k5, k6 = jax.random.split(key, 6)

    # --- Main test: NCHW complex input, batch=2, channels=4, spatial=16x16 ---
    N, C, H, W = 2, 4, 16, 16
    xr = jax.random.normal(k1, (N, C, H, W), dtype=jnp.float32)
    xi = jax.random.normal(k2, (N, C, H, W), dtype=jnp.float32)
    x = jax.lax.complex(xr, xi)

    # nn.PReLU() default init: single parameter = 0.25 (deterministic).
    alpha_real = 0.25
    alpha_imag = 0.25

    out = jax.block_until_ready(complex_prelu(x, alpha_real, alpha_imag))
    ref = _reference(x, alpha_real, alpha_imag)
    assert out.shape == x.shape
    assert out.dtype == jnp.complex64
    assert jnp.allclose(out, ref, atol=1e-6, rtol=1e-6)

    # --- Ragged test: size not a multiple of 128, distinct learned slopes ---
    yr = jax.random.normal(k3, (2, 3, 7, 5), dtype=jnp.float32)
    yi = jax.random.normal(k4, (2, 3, 7, 5), dtype=jnp.float32)
    y = jax.lax.complex(yr, yi)
    out2 = jax.block_until_ready(complex_prelu(y, 0.1, 0.7))
    ref2 = _reference(y, 0.1, 0.7)
    assert out2.shape == y.shape
    assert out2.dtype == jnp.complex64
    assert jnp.allclose(out2, ref2, atol=1e-6, rtol=1e-6)

    # --- Multi-block test: small tile forces >1 row block + a partial last
    #     block (rows8=24, tile_rows=16 -> grid=(2,2) with masked tail). ---
    zr = jax.random.normal(k5, (2, 4, 38, 38), dtype=jnp.float32)
    zi = jax.random.normal(k6, (2, 4, 38, 38), dtype=jnp.float32)
    z = jax.lax.complex(zr, zi)
    out3 = jax.block_until_ready(complex_prelu(z, 0.3, 0.05, tile_rows=16))
    ref3 = _reference(z, 0.3, 0.05)
    assert out3.shape == z.shape
    assert out3.dtype == jnp.complex64
    assert jnp.allclose(out3, ref3, atol=1e-6, rtol=1e-6)

    print("KERNEL_OK")
</pallas_src>

<mosaic_0001>
module attributes {stable_mosaic.version = 11 : i64} {
  func.func @_complex_prelu_kernel(%arg0: i32, %arg1: i32, %arg2: memref<2xf32, #tpu.memory_space<smem>>, %arg3: memref<1x8x512xf32, #tpu.memory_space<vmem>>, %arg4: memref<1x8x512xf32, #tpu.memory_space<vmem>>) attributes {dimension_semantics = [#tpu.dimension_semantics<parallel>, #tpu.dimension_semantics<parallel>], iteration_bounds = array<i64: 2, 1>, scalar_prefetch = 0 : i64, scratch_operands = 0 : i64, tpu.core_type = #tpu.core_type<tc>, window_params = [{transform_indices = @transform_0, window_bounds = array<i64: 2>}, {transform_indices = @transform_1, window_bounds = array<i64: 1, 8, 512>}, {transform_indices = @transform_2, window_bounds = array<i64: 1, 8, 512>}]} {
    %0 = arith.index_cast %arg0 : i32 to index
    %1 = memref.load %arg2[%0] : memref<2xf32, #tpu.memory_space<smem>>
    %c0 = arith.constant 0 : index
    %c0_0 = arith.constant 0 : index
    %c0_1 = arith.constant 0 : index
    %2 = vector.load %arg3[%c0, %c0_0, %c0_1] : memref<1x8x512xf32, #tpu.memory_space<vmem>>, vector<1x8x512xf32>
    %cst = arith.constant 0.000000e+00 : f32
    %3 = vector.broadcast %cst : f32 to vector<1x8x512xf32>
    %4 = arith.cmpf oge, %2, %3 : vector<1x8x512xf32>
    %5 = vector.broadcast %1 : f32 to vector<1x8x512xf32>
    %6 = arith.mulf %5, %2 : vector<1x8x512xf32>
    %7 = arith.select %4, %2, %6 : vector<1x8x512xi1>, vector<1x8x512xf32>
    %c0_2 = arith.constant 0 : index
    %c0_3 = arith.constant 0 : index
    %c0_4 = arith.constant 0 : index
    %8 = vector.load %arg4[%c0_2, %c0_3, %c0_4] : memref<1x8x512xf32, #tpu.memory_space<vmem>>, vector<1x8x512xf32>
    tpu.vector_store %arg4[%c0_2, %c0_3, %c0_4], %7 {strides = array<i32>} : memref<1x8x512xf32, #tpu.memory_space<vmem>>, vector<1x8x512xf32>,
    return
  }
  func.func @transform_0(%arg0: i32, %arg1: i32) -> i32 {
    %c0_i32 = arith.constant 0 : i32
    %c0_i32_0 = arith.constant 0 : i32
    return %c0_i32 : i32
  }
  func.func @transform_1(%arg0: i32, %arg1: i32) -> (i32, i32, i32) {
    %c0_i32 = arith.constant 0 : i32
    %c0_i32_0 = arith.constant 0 : i32
    return %arg0, %arg1, %c0_i32 : i32, i32, i32
  }
  func.func @transform_2(%arg0: i32, %arg1: i32) -> (i32, i32, i32) {
    %c0_i32 = arith.constant 0 : i32
    %c0_i32_0 = arith.constant 0 : i32
    return %arg0, %arg1, %c0_i32 : i32, i32, i32
  }
}

</mosaic_0001>

<llo_original>
// kernel: tpu_custom_call.1
$region0: #{tpu_custom_call.1}
  #allocation0 [shape = 'u32[]', space=smem, size = 0x4, offset = 0x4, fixed_abs, tag = 'smem constant byte address 0x4 - core index']
  #allocation1 [shape = 'u32[72,128]{1,0:T(1,128)}', space=vmem, size = 0x9000, scoped, tag = 'internal scratch']
  %s0 = inlined_call_operand.vmem [shape: f32[2], index: 0, kind: input, shape index: {}]
  %s1 = inlined_call_operand.hbm [shape: f32[2,8,512], index: 1, kind: input, shape index: {}, may-alias: {1,2}]
  %s2 = inlined_call_operand.hbm [shape: f32[2,8,512], index: 2, kind: output, shape index: {}, may-alias: {1,2}]
  %s3 = sld [smem:[#allocation0]]
  $region49: #{tpu_custom_call.1} parent=0
    _
  %s5 = ssub.s32 1, %s3
  %s6 = scalar_select 0, %s5, %s3
  $region1: #{tpu_custom_call.1} parent=0
    #allocation2 [shape = 'u8[512]{0}', space=smem, size = 0x200, scoped, tag = 'input window, operand 0, single buffered']
    #allocation3 [shape = 's32[2]{0}', space=sflag, size = 0x8, scoped, tag = 'scoped memory for tpu_custom_call.1']
    #allocation4 [shape = 's32[2]{0}', space=sflag, size = 0x8, scoped, tag = 'scoped memory for tpu_custom_call.1']
    #allocation5 [shape = 's32[2]{0}', space=sflag, size = 0x8, scoped, tag = 'scoped memory for tpu_custom_call.1']
    #allocation6 [shape = 'u8[32768]{0}', space=vmem, size = 0x8000, scoped, tag = 'input window, operand 1']
    #allocation7 [shape = 'u8[32768]{0}', space=vmem, size = 0x8000, scoped, tag = 'output window, operand 0']
    %7 = vsyncpa [#allocation5], 0
    %8 = vsyncpa [#allocation3], 0
    %s9 = scalar_lea.sflag [#allocation3], 1
    %10 = vsyncpa %s9, 0
    %11 = vsyncpa [#allocation4], 0
    %s12 = scalar_lea.sflag [#allocation4], 1
    %13 = vsyncpa %s12, 0
    loop: start=0, step=1, limit=4
    $region2: #{tpu_custom_call.1} parent=1 // loop_pre_header
      _
    $region3: #{tpu_custom_call.1} parent=1 // loop_header
      %s15 = sphi 0, %s19
      %p16 = scmp.ge.s32.totalorder %s15, 4
      %s22 = sphi 0, %s34
      %s23 = sphi 0, %s30
      %s24 = sphi 0, %s22
      %s25 = sphi 0, %s23
      %s26 = sphi 0, %s24
      %s27 = sphi 0, %s25
      %s35 = sphi 0, %s35
      %s37 = sphi 0, %s35
      %s38 = sphi 0, %s37
      %s52 = sphi 0, %s38
      %s60 = sphi 0, %s62
      %s63 = sphi 0, %s60
      %s64 = sphi 0, %s63
      %s80 = sphi 0, %s64
      %s88 = sphi 0, %s90
      %s91 = sphi 0, %s88
      %s92 = sphi 0, %s91
      %s108 = sphi 0, %s92
    $region4: #{tpu_custom_call.1} parent=1 // loop_header_branch
      %18 = sbr.rel (%p16) target = $region8
    $region5: #{tpu_custom_call.1} parent=1 // loop_body
      %s20 = ssub.s32 %s15, 1
      %s21 = ssub.s32 %s15, 2
      %s28 = sadd.s32 1, %s23
      %p29 = scmp.ge.s32.totalorder %s28, 1
      %s30 = scalar_select %p29, 0, %s28
      %s31 = sadd.s32 1, %s22
      %s32 = scalar_select %p29, %s31, %s22
      %p33 = scmp.ge.s32.totalorder %s32, 2
      %s34 = scalar_select %p33, 0, %s32
      %s36 = sadd.s32 %s35, 1
      %p39 = scmp.eq.s32.totalorder %s15, 1
      %p40 = scmp.ne.s32.totalorder %s35, %s37
      %p41 = scmp.eq.s32.totalorder %s15, 0
      %p42 = por %p40, %p41
      %p43 = scmp.ne.s32.totalorder %s35, %s37
      %p44 = scmp.eq.s32.totalorder %s20, 1
      %p45 = por %p43, %p44
      %p46 = scmp.ne.s32.totalorder %s37, %s38
      %p47 = scmp.eq.s32.totalorder %s20, 0
      %p48 = por %p46, %p47
      %p49 = scmp.ne.s32.totalorder %s37, %s38
      %p50 = scmp.eq.s32.totalorder %s21, 1
      %p51 = por %p49, %p50
      %p53 = scmp.ne.s32.totalorder %s38, %s52
      %p54 = scmp.eq.s32.totalorder %s21, 0
      %p55 = por %p53, %p54
      %s56 = ssub.s32 %s22, %s34
      %s57 = ssub.s32 %s23, %s30
      %s58 = sor.u32 %s56, %s57
      %p59 = scmp.eq.s32.totalorder %s58, 0
      %s61 = sadd.s32 %s60, 1
      %s62 = scalar_select %p59, %s60, %s61
      %p65 = pneg %p59
      %p66 = scmp.eq.s32.totalorder %s15, 1
      %p67 = por %p65, %p66
      %p68 = scmp.ne.s32.totalorder %s60, %s63
      %p69 = scmp.eq.s32.totalorder %s15, 0
      %p70 = por %p68, %p69
      %p71 = scmp.ne.s32.totalorder %s60, %s63
      %p72 = scmp.eq.s32.totalorder %s20, 1
      %p73 = por %p71, %p72
      %p74 = scmp.ne.s32.totalorder %s63, %s64
      %p75 = scmp.eq.s32.totalorder %s20, 0
      %p76 = por %p74, %p75
      %p77 = scmp.ne.s32.totalorder %s63, %s64
      %p78 = scmp.eq.s32.totalorder %s21, 1
      %p79 = por %p77, %p78
      %p81 = scmp.ne.s32.totalorder %s64, %s80
      %p82 = scmp.eq.s32.totalorder %s21, 0
      %p83 = por %p81, %p82
      %s84 = ssub.s32 %s22, %s34
      %s85 = ssub.s32 %s23, %s30
      %s86 = sor.u32 %s84, %s85
      %p87 = scmp.eq.s32.totalorder %s86, 0
      %s89 = sadd.s32 %s88, 1
      %s90 = scalar_select %p87, %s88, %s89
      %p93 = pneg %p87
      %p94 = scmp.eq.s32.totalorder %s15, 1
      %p95 = por %p93, %p94
      %p96 = scmp.ne.s32.totalorder %s88, %s91
      %p97 = scmp.eq.s32.totalorder %s15, 0
      %p98 = por %p96, %p97
      %p99 = scmp.ne.s32.totalorder %s88, %s91
      %p100 = scmp.eq.s32.totalorder %s20, 1
      %p101 = por %p99, %p100
      %p102 = scmp.ne.s32.totalorder %s91, %s92
      %p103 = scmp.eq.s32.totalorder %s20, 0
      %p104 = por %p102, %p103
      %p105 = scmp.ne.s32.totalorder %s91, %s92
      %p106 = scmp.eq.s32.totalorder %s21, 1
      %p107 = por %p105, %p106
      %p109 = scmp.ne.s32.totalorder %s92, %s108
      %p110 = scmp.eq.s32.totalorder %s21, 0
      %p111 = por %p109, %p110
      %p112 = scmp.le.s32.totalorder 1, %s15
      %p113 = scmp.lt.s32.totalorder %s15, 3
      %p114 = pnand %p112, %p113
      %p115 = pneg %p114
      // Predicated region
      $region9: #{tpu_custom_call.1} parent=5 // pred_check
        _
      $region10: #{tpu_custom_call.1} parent=5 // pred_check_branch
        %117 = sbr.rel (%p114) target = $region12
      $region11: #{tpu_custom_call.1} parent=5 // pred_region
        %s118 = ssub.s32 %s15, 1
        // Predicated region
        $region13: #{tpu_custom_call.1} parent=11 // pred_check
          %p119 = pneg %p48
        $region14: #{tpu_custom_call.1} parent=11 // pred_check_branch
          %121 = sbr.rel (%p119) target = $region16
        $region15: #{tpu_custom_call.1} parent=11 // pred_region
          %123 = vsyncadd [#allocation5], 0
          %s125 = sshll.u32 %s0, 4
          %s126 = int_to_ptr.vmem [resolvable:$true] %s125
          %128 = dma.vmem_to_smem %s126, 16, [#allocation2], [#allocation5]
        $region16: #{tpu_custom_call.1} parent=11 // pred_fallthru
          _
      $region12: #{tpu_custom_call.1} parent=5 // pred_fallthru
        _
      %p129 = scmp.lt.s32.totalorder %s15, 2
      // Predicated region
      $region17: #{tpu_custom_call.1} parent=5 // pred_check
        %p130 = pneg %p129
      $region18: #{tpu_custom_call.1} parent=5 // pred_check_branch
        %132 = sbr.rel (%p130) target = $region20
      $region19: #{tpu_custom_call.1} parent=5 // pred_region
        // Predicated region
        $region21: #{tpu_custom_call.1} parent=19 // pred_check
          %p133 = pneg %p70
        $region22: #{tpu_custom_call.1} parent=19 // pred_check_branch
          %135 = sbr.rel (%p133) target = $region24
        $region23: #{tpu_custom_call.1} parent=19 // pred_region
          %s136 = sand.u32 %s60, 1
          %s137 = scalar_lea.sflag [#allocation3], %s136
          %s138 = sand.u32 %s60, 1
          %s139 = smul.addr %s138, 32
          %s140 = scalar_lea.vmem [#allocation6], %s139
          %142 = vsyncadd %s137, 0
          %s143 = smul.addr %s23, 4
          %s144 = smul.addr %s22, 4
          %s145 = sadd.s32 %s143, %s144
          %s146 = smul.addr %s145, 8
          %s147 = scalar_lea.hbm %s1, %s146
          %s149 = sshll.u32 %s147, 4
          %s150 = int_to_ptr.hbm [resolvable:$true] %s149
          %s151 = sshll.u32 %s140, 4
          %s152 = int_to_ptr.vmem [resolvable:$true] %s151
          %154 = dma.hbm_to_vmem [thread:$0]  %s150, 512, %s152, %s137
        $region24: #{tpu_custom_call.1} parent=19 // pred_fallthru
          _
      $region20: #{tpu_custom_call.1} parent=5 // pred_fallthru
        _
      %p155 = scmp.le.s32.totalorder 1, %s15
      %p156 = scmp.lt.s32.totalorder %s15, 3
      %p157 = pnand %p155, %p156
      %p158 = pneg %p157
      // Predicated region
      $region25: #{tpu_custom_call.1} parent=5 // pred_check
        _
      $region26: #{tpu_custom_call.1} parent=5 // pred_check_branch
        %160 = sbr.rel (%p157) target = $region28
      $region27: #{tpu_custom_call.1} parent=5 // pred_region
        %s161 = ssub.s32 %s15, 1
        // Predicated region
        $region29: #{tpu_custom_call.1} parent=27 // pred_check
          %p162 = pneg %p48
        $region30: #{tpu_custom_call.1} parent=27 // pred_check_branch
          %164 = sbr.rel (%p162) target = $region32
        $region31: #{tpu_custom_call.1} parent=27 // pred_region
          %166 = dma.done [#allocation5], 16
        $region32: #{tpu_custom_call.1} parent=27 // pred_fallthru
          _
        %s167 = sand.u32 %s63, 1
        %s168 = scalar_lea.sflag [#allocation3], %s167
        %s169 = sand.u32 %s63, 1
        %s170 = smul.addr %s169, 32
        %s171 = scalar_lea.vmem [#allocation6], %s170
        // Predicated region
        $region33: #{tpu_custom_call.1} parent=27 // pred_check
          %p172 = pneg %p76
        $region34: #{tpu_custom_call.1} parent=27 // pred_check_branch
          %174 = sbr.rel (%p172) target = $region36
        $region35: #{tpu_custom_call.1} parent=27 // pred_region
          %176 = dma.done %s168, 512
        $region36: #{tpu_custom_call.1} parent=27 // pred_fallthru
          _
        %177 = sfence
        %p178 = pneg %p48
        %p179 = pneg %p45
        %s180 = sand.u32 %s63, 1
        %s181 = scalar_lea.sflag [#allocation3], %s180
        %s182 = sand.u32 %s63, 1
        %s183 = smul.addr %s182, 32
        %s184 = scalar_lea.vmem [#allocation6], %s183
        %p185 = pneg %p76
        %p186 = pneg %p73
        %p187 = pneg %p104
        %p188 = pneg %p101
        %s189 = sand.u32 %s91, 1
        %s190 = scalar_lea.sflag [#allocation4], %s189
        %s191 = sand.u32 %s91, 1
        %s192 = smul.addr %s191, 32
        %s193 = scalar_lea.vmem [#allocation7], %s192
        %s194 = sld [smem:[#allocation2 + %s24]]
        %v195 = vld [vmem:[%s171] sm:$0xff]
        %v196 = vld [vmem:[%s171 + $0x8] sm:$0xff]
        %v197 = vld [vmem:[%s171 + $0x10] sm:$0xff]
        %v198 = vld [vmem:[%s171 + $0x18] sm:$0xff]
        %vm199 = vcmp.ge.f32.partialorder %v195, 0.0
        %vm200 = vcmp.ge.f32.partialorder %v196, 0.0
        %vm201 = vcmp.ge.f32.partialorder %v197, 0.0
        %vm202 = vcmp.ge.f32.partialorder %v198, 0.0
        %v203 = vstv %s194
        %v204 = vmul.f32 %v203, %v195
        %v205 = vmul.f32 %v203, %v196
        %v206 = vmul.f32 %v203, %v197
        %v207 = vmul.f32 %v203, %v198
        %v208 = vsel %vm199, %v195, %v204
        %v209 = vsel %vm200, %v196, %v205
        %v210 = vsel %vm201, %v197, %v206
        %v211 = vsel %vm202, %v198, %v207
        %212 = vst [vmem:[%s193] sm:$0xff] %v208
        %213 = vst [vmem:[%s193 + $0x8] sm:$0xff] %v209
        %214 = vst [vmem:[%s193 + $0x10] sm:$0xff] %v210
        %215 = vst [vmem:[%s193 + $0x18] sm:$0xff] %v211
        %s216 = sand.u32 %s91, 1
        %s217 = scalar_lea.sflag [#allocation4], %s216
        %s218 = sand.u32 %s91, 1
        %s219 = smul.addr %s218, 32
        %s220 = scalar_lea.vmem [#allocation7], %s219
        // Predicated region
        $region37: #{tpu_custom_call.1} parent=27 // pred_check
          %p221 = pneg %p101
        $region38: #{tpu_custom_call.1} parent=27 // pred_check_branch
          %223 = sbr.rel (%p221) target = $region40
        $region39: #{tpu_custom_call.1} parent=27 // pred_region
          %225 = vsyncadd %s217, 0
          %s226 = smul.addr %s25, 4
          %s227 = smul.addr %s24, 4
          %s228 = sadd.s32 %s226, %s227
          %s229 = smul.addr %s228, 8
          %s230 = scalar_lea.hbm %s2, %s229
          %s232 = sshll.u32 %s220, 4
          %s233 = int_to_ptr.vmem [resolvable:$true] %s232
          %s234 = sshll.u32 %s230, 4
          %s235 = int_to_ptr.hbm [resolvable:$true] %s234
          %237 = dma.vmem_to_hbm [thread:$0]  %s233, 512, %s235, %s217
        $region40: #{tpu_custom_call.1} parent=27 // pred_fallthru
          _
      $region28: #{tpu_custom_call.1} parent=5 // pred_fallthru
        _
      %p238 = scmp.le.s32.totalorder 2, %s15
      // Predicated region
      $region41: #{tpu_custom_call.1} parent=5 // pred_check
        %p239 = pneg %p238
      $region42: #{tpu_custom_call.1} parent=5 // pred_check_branch
        %241 = sbr.rel (%p239) target = $region44
      $region43: #{tpu_custom_call.1} parent=5 // pred_region
        %s242 = ssub.s32 %s15, 2
        // Predicated region
        $region45: #{tpu_custom_call.1} parent=43 // pred_check
          %p243 = pneg %p107
        $region46: #{tpu_custom_call.1} parent=43 // pred_check_branch
          %245 = sbr.rel (%p243) target = $region48
        $region47: #{tpu_custom_call.1} parent=43 // pred_region
          %s246 = sand.u32 %s92, 1
          %s247 = scalar_lea.sflag [#allocation4], %s246
          %s248 = sand.u32 %s92, 1
          %s249 = smul.addr %s248, 32
          %s250 = scalar_lea.vmem [#allocation7], %s249
          %252 = dma.done %s247, 512
        $region48: #{tpu_custom_call.1} parent=43 // pred_fallthru
          _
      $region44: #{tpu_custom_call.1} parent=5 // pred_fallthru
        _
    $region6: #{tpu_custom_call.1} parent=1 // loop_footer
      %s19 = sadd.s32 1, %s15
    $region7: #{tpu_custom_call.1} parent=1 // loop_footer_branch
      %14 = sbr.rel target = $region3
    $region8: #{tpu_custom_call.1} parent=1 // loop_exit
      _
    %253 = vsyncpa [#allocation3], 1
    %s254 = scalar_lea.sflag [#allocation3], 1
    %255 = vsyncpa %s254, 1
    %256 = vsyncpa [#allocation4], 1
    %s257 = scalar_lea.sflag [#allocation4], 1
    %258 = vsyncpa %s257, 1
    %259 = vsyncpa [#allocation5], 1
    %s260 = scalar_lea.sflag [#allocation5], 1
    %261 = vsyncpa %s260, 1

</llo_original>
